<compile_context>
chip_gen: v7x
topology: tpu7x:2x2x1
jax: 0.10.0
libtpu: 0.0.40
codegen_flags: <defaults>
</compile_context>

<pallas_src>
import functools

import jax
import jax.numpy as jnp
from jax.experimental import pallas as pl
from jax.experimental.pallas import tpu as pltpu

_LANE = 128
_TARGET_TILE_BYTES = 4 * 1024 * 1024  # ~4 MiB of x per grid step


def _cdiv(a, b):
    return (a + b - 1) // b


def _round_up(a, m):
    return ((a + m - 1) // m) * m


def _attention_block_kernel(x_ref, w1_ref, b1_ref, w2_ref, b2_ref, o_ref):
    # x_ref/o_ref: (bn, C, tl)   w1_ref: (Hp, C) [x dtype]   b1_ref: (Hp, 1) f32
    # w2_ref: (C, Hp) f32        b2_ref: (C, 1) f32
    w1 = w1_ref[...]
    b1 = b1_ref[...]
    w2 = w2_ref[...]
    b2 = b2_ref[...]
    bn = x_ref.shape[0]

    # Full f32 precision for f32 inputs (cost hidden: kernel is HBM-bound).
    prec = jax.lax.Precision.HIGHEST if x_ref.dtype == jnp.float32 else None

    def one_batch(b):
        xb = x_ref[b]  # (C, tl), native dtype -- no f32 copy of the tile
        # 1x1 conv #1: h = relu(W1 @ x + b1)              -> (Hp, tl), f32
        h = jnp.dot(w1, xb, preferred_element_type=jnp.float32, precision=prec) + b1
        h = jnp.maximum(h, 0.0)
        # 1x1 conv #2: attn = sigmoid(W2 @ h + b2)        -> (C, tl), f32
        logits = jnp.dot(w2, h, preferred_element_type=jnp.float32, precision=prec) + b2
        attn = jax.nn.sigmoid(logits)
        # Gate the input; store is lane-dense except the (masked) final tile.
        o_ref[b] = (xb * attn).astype(o_ref.dtype)

    if bn <= 8:
        for b in range(bn):
            one_batch(b)
    else:
        def body(b, carry):
            one_batch(b)
            return carry

        jax.lax.fori_loop(0, bn, body, 0)


@functools.partial(jax.jit, static_argnames=("tile_l", "block_n"))
def attention_block(x_ncl, w1, b1, w2, b2, *, tile_l=None, block_n=None):
    """x_ncl: (N, C, L). w1: (H, C), b1: (H,), w2: (C, H), b2: (C,); H = C // 8."""
    N, C, L = x_ncl.shape
    H = w1.shape[0]
    assert w1.shape == (H, C) and w2.shape == (C, H)
    assert b1.shape == (H,) and b2.shape == (C,)

    itemsize = jnp.dtype(x_ncl.dtype).itemsize

    # ---- length-axis tile: either the full L, or a lane-aligned chunk sized
    # so one tile of x is ~_TARGET_TILE_BYTES.
    tl_cap = max(_LANE, (_TARGET_TILE_BYTES // (C * itemsize) // _LANE) * _LANE)
    tl = L if L <= tl_cap else tl_cap
    if tile_l is not None:
        tl = tile_l if tile_l >= L else max(_LANE, (tile_l // _LANE) * _LANE)

    # ---- fold batch into the block when a single tile already covers L, so
    # each grid step still moves megabytes for tiny C*L.
    if block_n is not None:
        bn = block_n
        assert N % bn == 0
    elif tl == L:
        want = min(N, 512, max(1, _TARGET_TILE_BYTES // max(C * L * itemsize, 1)))
        bn = max(d for d in range(1, want + 1) if N % d == 0)
    else:
        bn = 1

    # ---- v7x megacore balance: prefer >= 2 grid steps when possible.
    if (N // bn) * _cdiv(L, tl) < 2:
        if N > 1:
            bn = max(d for d in range(1, N // 2 + 1) if N % d == 0)
        elif L >= 2 * _LANE:
            tl = _round_up(_cdiv(L, 2), _LANE)

    # ---- weights: prepped once, VMEM-resident across all grid steps.
    # Pad H to a multiple of 8 sublanes; padded rows have zero weight + zero
    # bias (-> relu gives exactly 0) and zero columns in w2 (-> contribute 0).
    Hp = _round_up(max(H, 1), 8)
    w1_p = jnp.zeros((Hp, C), x_ncl.dtype).at[:H, :].set(w1.astype(x_ncl.dtype))
    b1_p = jnp.zeros((Hp, 1), jnp.float32).at[:H, 0].set(b1.astype(jnp.float32))
    w2_p = jnp.zeros((C, Hp), jnp.float32).at[:, :H].set(w2.astype(jnp.float32))
    b2_p = b2.astype(jnp.float32).reshape(C, 1)

    grid = (N // bn, _cdiv(L, tl))

    return pl.pallas_call(
        _attention_block_kernel,
        out_shape=jax.ShapeDtypeStruct((N, C, L), x_ncl.dtype),
        grid_spec=pltpu.PrefetchScalarGridSpec(
            num_scalar_prefetch=0,
            grid=grid,
            in_specs=[
                pl.BlockSpec((bn, C, tl), lambda n, l: (n, 0, l)),  # x tile (NCL)
                pl.BlockSpec((Hp, C), lambda n, l: (0, 0)),         # W1 (resident)
                pl.BlockSpec((Hp, 1), lambda n, l: (0, 0)),         # b1
                pl.BlockSpec((C, Hp), lambda n, l: (0, 0)),         # W2 (resident)
                pl.BlockSpec((C, 1), lambda n, l: (0, 0)),          # b2
            ],
            out_specs=pl.BlockSpec((bn, C, tl), lambda n, l: (n, 0, l)),
        ),
        compiler_params=pltpu.CompilerParams(
            dimension_semantics=("parallel", "parallel"),
            vmem_limit_bytes=48 * 1024 * 1024,  # v7x-safe (64 MiB/TC), ample for v5e/v6e
        ),
    )(x_ncl, w1_p, b1_p, w2_p, b2_p)


def _reference(x_ncl, w1, b1, w2, b2):
    # Pure-JAX reference of the PyTorch forward (1x1 convs as einsums).
    hi = jax.lax.Precision.HIGHEST
    h = jnp.einsum("ncl,hc->nhl", x_ncl, w1, precision=hi) + b1[None, :, None]
    h = jnp.maximum(h, 0.0)
    a = jnp.einsum("nhl,ch->ncl", h, w2, precision=hi) + b2[None, :, None]
    return x_ncl * jax.nn.sigmoid(a)


if __name__ == "__main__":
    key = jax.random.PRNGKey(0)
    kx, k1, kb1, k2, kb2, kx2 = jax.random.split(key, 6)

    # Small shapes consistent with the module (in_channels must be >= 8).
    N, C, L = 2, 32, 16
    H = C // 8

    x = jax.random.normal(kx, (N, C, L), dtype=jnp.float32)
    # PyTorch Conv1d weights are (out_ch, in_ch, 1); size-1 kernel dim squeezed.
    w1 = jax.random.normal(k1, (H, C), dtype=jnp.float32) * 0.1
    b1 = jax.random.normal(kb1, (H,), dtype=jnp.float32) * 0.1
    w2 = jax.random.normal(k2, (C, H), dtype=jnp.float32) * 0.1
    b2 = jax.random.normal(kb2, (C,), dtype=jnp.float32) * 0.1

    # Base case (batch-folded block, single L tile).
    out = jax.block_until_ready(attention_block(x, w1, b1, w2, b2))
    ref = _reference(x, w1, b1, w2, b2)
    assert out.shape == (N, C, L)
    assert jnp.allclose(out, ref, atol=1e-4, rtol=1e-4), "mismatch vs reference"

    # Tiled L with a partial final block (no wrapper pad/slice; masked stores).
    L2 = 200
    x2 = jax.random.normal(kx2, (N, C, L2), dtype=jnp.float32)
    out2 = jax.block_until_ready(attention_block(x2, w1, b1, w2, b2, tile_l=128))
    ref2 = _reference(x2, w1, b1, w2, b2)
    assert out2.shape == (N, C, L2)
    assert jnp.allclose(out2, ref2, atol=1e-4, rtol=1e-4), "mismatch (tiled/partial)"

    # bf16 HBM I/O path (v6e/v7x bandwidth saver); loose tolerance vs f32 ref.
    out3 = jax.block_until_ready(attention_block(x.astype(jnp.bfloat16), w1, b1, w2, b2))
    assert jnp.allclose(out3.astype(jnp.float32), ref, atol=5e-2, rtol=5e-2), "mismatch (bf16)"

    print("KERNEL_OK")
</pallas_src>

<mosaic_0001>
module attributes {stable_mosaic.version = 11 : i64} {
  func.func @_attention_block_kernel(%arg0: i32, %arg1: i32, %arg2: memref<1x32x16xf32, #tpu.memory_space<vmem>>, %arg3: memref<8x32xf32, #tpu.memory_space<vmem>>, %arg4: memref<8x1xf32, #tpu.memory_space<vmem>>, %arg5: memref<32x8xf32, #tpu.memory_space<vmem>>, %arg6: memref<32x1xf32, #tpu.memory_space<vmem>>, %arg7: memref<1x32x16xf32, #tpu.memory_space<vmem>>) attributes {dimension_semantics = [#tpu.dimension_semantics<parallel>, #tpu.dimension_semantics<parallel>], iteration_bounds = array<i64: 2, 1>, scalar_prefetch = 0 : i64, scratch_operands = 0 : i64, tpu.core_type = #tpu.core_type<tc>, window_params = [{transform_indices = @transform_0, window_bounds = array<i64: 1, 32, 16>}, {pipeline_mode = #tpu.pipeline_mode<synchronous>, transform_indices = @transform_1, window_bounds = array<i64: 8, 32>}, {pipeline_mode = #tpu.pipeline_mode<synchronous>, transform_indices = @transform_2, window_bounds = array<i64: 8, 1>}, {pipeline_mode = #tpu.pipeline_mode<synchronous>, transform_indices = @transform_3, window_bounds = array<i64: 32, 8>}, {pipeline_mode = #tpu.pipeline_mode<synchronous>, transform_indices = @transform_4, window_bounds = array<i64: 32, 1>}, {transform_indices = @transform_5, window_bounds = array<i64: 1, 32, 16>}]} {
    %c0 = arith.constant 0 : index
    %c0_0 = arith.constant 0 : index
    %0 = vector.load %arg3[%c0, %c0_0] : memref<8x32xf32, #tpu.memory_space<vmem>>, vector<8x32xf32>
    %c0_1 = arith.constant 0 : index
    %c0_2 = arith.constant 0 : index
    %1 = vector.load %arg4[%c0_1, %c0_2] : memref<8x1xf32, #tpu.memory_space<vmem>>, vector<8x1xf32>
    %c0_3 = arith.constant 0 : index
    %c0_4 = arith.constant 0 : index
    %2 = vector.load %arg5[%c0_3, %c0_4] : memref<32x8xf32, #tpu.memory_space<vmem>>, vector<32x8xf32>
    %c0_5 = arith.constant 0 : index
    %c0_6 = arith.constant 0 : index
    %3 = vector.load %arg6[%c0_5, %c0_6] : memref<32x1xf32, #tpu.memory_space<vmem>>, vector<32x1xf32>
    %c0_7 = arith.constant 0 : index
    %c0_8 = arith.constant 0 : index
    %c0_9 = arith.constant 0 : index
    %4 = vector.load %arg2[%c0_7, %c0_8, %c0_9] : memref<1x32x16xf32, #tpu.memory_space<vmem>>, vector<1x32x16xf32>
    %5 = vector.shape_cast %4 : vector<1x32x16xf32> to vector<32x16xf32>
    %cst = arith.constant dense<0.000000e+00> : vector<8x16xf32>
    %6 = tpu.matmul %0, %5, %cst {dimension_numbers = #tpu.dot_dimension_numbers<[1], [0], [0], [1], [0, 0, 1, 1], [], []>, precision = #tpu.contract_precision<fp32>} : vector<8x32xf32>, vector<32x16xf32>, vector<8x16xf32> -> vector<8x16xf32>
    %7 = vector.broadcast %1 : vector<8x1xf32> to vector<8x16xf32>
    %8 = arith.addf %6, %7 : vector<8x16xf32>
    %cst_10 = arith.constant 0.000000e+00 : f32
    %9 = vector.broadcast %cst_10 : f32 to vector<8x16xf32>
    %10 = arith.maximumf %8, %9 : vector<8x16xf32>
    %cst_11 = arith.constant dense<0.000000e+00> : vector<32x16xf32>
    %11 = tpu.matmul %2, %10, %cst_11 {dimension_numbers = #tpu.dot_dimension_numbers<[1], [0], [0], [1], [0, 0, 1, 1], [], []>, precision = #tpu.contract_precision<fp32>} : vector<32x8xf32>, vector<8x16xf32>, vector<32x16xf32> -> vector<32x16xf32>
    %12 = vector.broadcast %3 : vector<32x1xf32> to vector<32x16xf32>
    %13 = arith.addf %11, %12 : vector<32x16xf32>
    %14 = arith.negf %13 : vector<32x16xf32>
    %15 = math.exp %14 : vector<32x16xf32>
    %cst_12 = arith.constant 1.000000e+00 : f32
    %16 = vector.broadcast %cst_12 : f32 to vector<32x16xf32>
    %17 = arith.addf %16, %15 : vector<32x16xf32>
    %18 = arith.divf %16, %17 : vector<32x16xf32>
    %19 = arith.mulf %5, %18 : vector<32x16xf32>
    %c0_13 = arith.constant 0 : index
    %c0_14 = arith.constant 0 : index
    %c0_15 = arith.constant 0 : index
    %20 = vector.load %arg7[%c0_13, %c0_14, %c0_15] : memref<1x32x16xf32, #tpu.memory_space<vmem>>, vector<1x32x16xf32>
    %21 = vector.shape_cast %20 : vector<1x32x16xf32> to vector<32x16xf32>
    %22 = vector.shape_cast %19 : vector<32x16xf32> to vector<1x32x16xf32>
    tpu.vector_store %arg7[%c0_13, %c0_14, %c0_15], %22 {strides = array<i32>} : memref<1x32x16xf32, #tpu.memory_space<vmem>>, vector<1x32x16xf32>,
    return
  }
  func.func @transform_0(%arg0: i32, %arg1: i32) -> (i32, i32, i32) {
    %c0_i32 = arith.constant 0 : i32
    %c0_i32_0 = arith.constant 0 : i32
    return %arg0, %c0_i32, %arg1 : i32, i32, i32
  }
  func.func @transform_1(%arg0: i32, %arg1: i32) -> (i32, i32) {
    %c0_i32 = arith.constant 0 : i32
    %c0_i32_0 = arith.constant 0 : i32
    %c0_i32_1 = arith.constant 0 : i32
    return %c0_i32, %c0_i32_0 : i32, i32
  }
  func.func @transform_2(%arg0: i32, %arg1: i32) -> (i32, i32) {
    %c0_i32 = arith.constant 0 : i32
    %c0_i32_0 = arith.constant 0 : i32
    %c0_i32_1 = arith.constant 0 : i32
    return %c0_i32, %c0_i32_0 : i32, i32
  }
  func.func @transform_3(%arg0: i32, %arg1: i32) -> (i32, i32) {
    %c0_i32 = arith.constant 0 : i32
    %c0_i32_0 = arith.constant 0 : i32
    %c0_i32_1 = arith.constant 0 : i32
    return %c0_i32, %c0_i32_0 : i32, i32
  }
  func.func @transform_4(%arg0: i32, %arg1: i32) -> (i32, i32) {
    %c0_i32 = arith.constant 0 : i32
    %c0_i32_0 = arith.constant 0 : i32
    %c0_i32_1 = arith.constant 0 : i32
    return %c0_i32, %c0_i32_0 : i32, i32
  }
  func.func @transform_5(%arg0: i32, %arg1: i32) -> (i32, i32, i32) {
    %c0_i32 = arith.constant 0 : i32
    %c0_i32_0 = arith.constant 0 : i32
    return %arg0, %c0_i32, %arg1 : i32, i32, i32
  }
}

</mosaic_0001>

<llo_original>
// kernel: attention_block.1
$region0: #{attention_block.1}
  #allocation0 [shape = 'u32[]', space=smem, size = 0x4, offset = 0x4, fixed_abs, tag = 'smem constant byte address 0x4 - core index']
  #allocation1 [shape = 'u32[144,128]{1,0:T(1,128)}', space=vmem, size = 0x12000, scoped, tag = 'internal scratch']
  %s0 = inlined_call_operand.vmem [shape: f32[2,32,16], index: 0, kind: input, shape index: {}]
  %s1 = inlined_call_operand.vmem [shape: f32[8,32], index: 1, kind: input, shape index: {}]
  %s2 = inlined_call_operand.vmem [shape: f32[8,1], index: 2, kind: input, shape index: {}]
  %s3 = inlined_call_operand.vmem [shape: f32[32,8], index: 3, kind: input, shape index: {}]
  %s4 = inlined_call_operand.vmem [shape: f32[32,1], index: 4, kind: input, shape index: {}]
  %s5 = inlined_call_operand.vmem [shape: f32[2,32,16], index: 5, kind: output, shape index: {}]
  %s6 = sld [smem:[#allocation0]]
  $region53: #{attention_block.1} parent=0
    _
  %s8 = ssub.s32 1, %s6
  %s9 = scalar_select 0, %s8, %s6
  loop: start=0, step=1, limit=4
  $region2: #{attention_block.1} parent=0 // loop_pre_header
    _
  $region3: #{attention_block.1} parent=0 // loop_header
    %s11 = sphi 0, %s15
    %p12 = scmp.ge.s32.totalorder %s11, 4
    %s18 = sphi 0, %s30
    %s19 = sphi 0, %s26
    %s20 = sphi 0, %s18
    %s21 = sphi 0, %s19
    %s22 = sphi 0, %s20
    %s23 = sphi 0, %s21
    %s35 = sphi 0, %s37
    %s38 = sphi 0, %s35
    %s39 = sphi 0, %s38
    %s55 = sphi 0, %s39
    %s59 = sphi 0, %s59
    %s61 = sphi 0, %s59
    %s62 = sphi 0, %s61
    %s76 = sphi 0, %s62
    %s80 = sphi 0, %s80
    %s82 = sphi 0, %s80
    %s83 = sphi 0, %s82
    %s97 = sphi 0, %s83
    %s101 = sphi 0, %s101
    %s103 = sphi 0, %s101
    %s104 = sphi 0, %s103
    %s118 = sphi 0, %s104
    %s122 = sphi 0, %s122
    %s124 = sphi 0, %s122
    %s125 = sphi 0, %s124
    %s139 = sphi 0, %s125
    %s147 = sphi 0, %s149
    %s150 = sphi 0, %s147
    %s151 = sphi 0, %s150
    %s167 = sphi 0, %s151
  $region4: #{attention_block.1} parent=0 // loop_header_branch
    %14 = sbr.rel (%p12) target = $region8
  $region5: #{attention_block.1} parent=0 // loop_body
    %s16 = ssub.s32 %s11, 1
    %s17 = ssub.s32 %s11, 2
    %s24 = sadd.s32 1, %s19
    %p25 = scmp.ge.s32.totalorder %s24, 1
    %s26 = scalar_select %p25, 0, %s24
    %s27 = sadd.s32 1, %s18
    %s28 = scalar_select %p25, %s27, %s18
    %p29 = scmp.ge.s32.totalorder %s28, 2
    %s30 = scalar_select %p29, 0, %s28
    %s31 = ssub.s32 %s18, %s30
    %s32 = ssub.s32 %s19, %s26
    %s33 = sor.u32 %s31, %s32
    %p34 = scmp.eq.s32.totalorder %s33, 0
    %s36 = sadd.s32 %s35, 1
    %s37 = scalar_select %p34, %s35, %s36
    %p40 = pneg %p34
    %p41 = scmp.eq.s32.totalorder %s11, 1
    %p42 = por %p40, %p41
    %p43 = scmp.ne.s32.totalorder %s35, %s38
    %p44 = scmp.eq.s32.totalorder %s11, 0
    %p45 = por %p43, %p44
    %p46 = scmp.ne.s32.totalorder %s35, %s38
    %p47 = scmp.eq.s32.totalorder %s16, 1
    %p48 = por %p46, %p47
    %p49 = scmp.ne.s32.totalorder %s38, %s39
    %p50 = scmp.eq.s32.totalorder %s16, 0
    %p51 = por %p49, %p50
    %p52 = scmp.ne.s32.totalorder %s38, %s39
    %p53 = scmp.eq.s32.totalorder %s17, 1
    %p54 = por %p52, %p53
    %p56 = scmp.ne.s32.totalorder %s39, %s55
    %p57 = scmp.eq.s32.totalorder %s17, 0
    %p58 = por %p56, %p57
    %s60 = sadd.s32 %s59, 1
    %p63 = scmp.eq.s32.totalorder %s11, 1
    %p64 = scmp.ne.s32.totalorder %s59, %s61
    %p65 = scmp.eq.s32.totalorder %s11, 0
    %p66 = por %p64, %p65
    %p67 = scmp.ne.s32.totalorder %s59, %s61
    %p68 = scmp.eq.s32.totalorder %s16, 1
    %p69 = por %p67, %p68
    %p70 = scmp.ne.s32.totalorder %s61, %s62
    %p71 = scmp.eq.s32.totalorder %s16, 0
    %p72 = por %p70, %p71
    %p73 = scmp.ne.s32.totalorder %s61, %s62
    %p74 = scmp.eq.s32.totalorder %s17, 1
    %p75 = por %p73, %p74
    %p77 = scmp.ne.s32.totalorder %s62, %s76
    %p78 = scmp.eq.s32.totalorder %s17, 0
    %p79 = por %p77, %p78
    %s81 = sadd.s32 %s80, 1
    %p84 = scmp.eq.s32.totalorder %s11, 1
    %p85 = scmp.ne.s32.totalorder %s80, %s82
    %p86 = scmp.eq.s32.totalorder %s11, 0
    %p87 = por %p85, %p86
    %p88 = scmp.ne.s32.totalorder %s80, %s82
    %p89 = scmp.eq.s32.totalorder %s16, 1
    %p90 = por %p88, %p89
    %p91 = scmp.ne.s32.totalorder %s82, %s83
    %p92 = scmp.eq.s32.totalorder %s16, 0
    %p93 = por %p91, %p92
    %p94 = scmp.ne.s32.totalorder %s82, %s83
    %p95 = scmp.eq.s32.totalorder %s17, 1
    %p96 = por %p94, %p95
    %p98 = scmp.ne.s32.totalorder %s83, %s97
    %p99 = scmp.eq.s32.totalorder %s17, 0
    %p100 = por %p98, %p99
    %s102 = sadd.s32 %s101, 1
    %p105 = scmp.eq.s32.totalorder %s11, 1
    %p106 = scmp.ne.s32.totalorder %s101, %s103
    %p107 = scmp.eq.s32.totalorder %s11, 0
    %p108 = por %p106, %p107
    %p109 = scmp.ne.s32.totalorder %s101, %s103
    %p110 = scmp.eq.s32.totalorder %s16, 1
    %p111 = por %p109, %p110
    %p112 = scmp.ne.s32.totalorder %s103, %s104
    %p113 = scmp.eq.s32.totalorder %s16, 0
    %p114 = por %p112, %p113
    %p115 = scmp.ne.s32.totalorder %s103, %s104
    %p116 = scmp.eq.s32.totalorder %s17, 1
    %p117 = por %p115, %p116
    %p119 = scmp.ne.s32.totalorder %s104, %s118
    %p120 = scmp.eq.s32.totalorder %s17, 0
    %p121 = por %p119, %p120
    %s123 = sadd.s32 %s122, 1
    %p126 = scmp.eq.s32.totalorder %s11, 1
    %p127 = scmp.ne.s32.totalorder %s122, %s124
    %p128 = scmp.eq.s32.totalorder %s11, 0
    %p129 = por %p127, %p128
    %p130 = scmp.ne.s32.totalorder %s122, %s124
    %p131 = scmp.eq.s32.totalorder %s16, 1
    %p132 = por %p130, %p131
    %p133 = scmp.ne.s32.totalorder %s124, %s125
    %p134 = scmp.eq.s32.totalorder %s16, 0
    %p135 = por %p133, %p134
    %p136 = scmp.ne.s32.totalorder %s124, %s125
    %p137 = scmp.eq.s32.totalorder %s17, 1
    %p138 = por %p136, %p137
    %p140 = scmp.ne.s32.totalorder %s125, %s139
    %p141 = scmp.eq.s32.totalorder %s17, 0
    %p142 = por %p140, %p141
    %s143 = ssub.s32 %s18, %s30
    %s144 = ssub.s32 %s19, %s26
    %s145 = sor.u32 %s143, %s144
    %p146 = scmp.eq.s32.totalorder %s145, 0
    %s148 = sadd.s32 %s147, 1
    %s149 = scalar_select %p146, %s147, %s148
    %p152 = pneg %p146
    %p153 = scmp.eq.s32.totalorder %s11, 1
    %p154 = por %p152, %p153
    %p155 = scmp.ne.s32.totalorder %s147, %s150
    %p156 = scmp.eq.s32.totalorder %s11, 0
    %p157 = por %p155, %p156
    %p158 = scmp.ne.s32.totalorder %s147, %s150
    %p159 = scmp.eq.s32.totalorder %s16, 1
    %p160 = por %p158, %p159
    %p161 = scmp.ne.s32.totalorder %s150, %s151
    %p162 = scmp.eq.s32.totalorder %s16, 0
    %p163 = por %p161, %p162
    %p164 = scmp.ne.s32.totalorder %s150, %s151
    %p165 = scmp.eq.s32.totalorder %s17, 1
    %p166 = por %p164, %p165
    %p168 = scmp.ne.s32.totalorder %s151, %s167
    %p169 = scmp.eq.s32.totalorder %s17, 0
    %p170 = por %p168, %p169
    %p171 = scmp.le.s32.totalorder 1, %s11
    %p172 = scmp.lt.s32.totalorder %s11, 3
    %p173 = pnand %p171, %p172
    %p174 = pneg %p173
    // Predicated region
    $region9: #{attention_block.1} parent=5 // pred_check
      _
    $region10: #{attention_block.1} parent=5 // pred_check_branch
      %176 = sbr.rel (%p173) target = $region12
    $region11: #{attention_block.1} parent=5 // pred_region
      %s177 = ssub.s32 %s11, 1
      // Predicated region
      $region13: #{attention_block.1} parent=11 // pred_check
        %p178 = pneg %p72
      $region14: #{attention_block.1} parent=11 // pred_check_branch
        %180 = sbr.rel (%p178) target = $region16
      $region15: #{attention_block.1} parent=11 // pred_region
        _
      $region16: #{attention_block.1} parent=11 // pred_fallthru
        _
      // Predicated region
      $region17: #{attention_block.1} parent=11 // pred_check
        %p181 = pneg %p93
      $region18: #{attention_block.1} parent=11 // pred_check_branch
        %183 = sbr.rel (%p181) target = $region20
      $region19: #{attention_block.1} parent=11 // pred_region
        _
      $region20: #{attention_block.1} parent=11 // pred_fallthru
        _
      // Predicated region
      $region21: #{attention_block.1} parent=11 // pred_check
        %p184 = pneg %p114
      $region22: #{attention_block.1} parent=11 // pred_check_branch
        %186 = sbr.rel (%p184) target = $region24
      $region23: #{attention_block.1} parent=11 // pred_region
        _
      $region24: #{attention_block.1} parent=11 // pred_fallthru
        _
      // Predicated region
      $region25: #{attention_block.1} parent=11 // pred_check
        %p187 = pneg %p135
      $region26: #{attention_block.1} parent=11 // pred_check_branch
        %189 = sbr.rel (%p187) target = $region28
      $region27: #{attention_block.1} parent=11 // pred_region
        _
      $region28: #{attention_block.1} parent=11 // pred_fallthru
        _
    $region12: #{attention_block.1} parent=5 // pred_fallthru
      _
    %p190 = scmp.lt.s32.totalorder %s11, 2
    // Predicated region
    $region29: #{attention_block.1} parent=5 // pred_check
      %p191 = pneg %p190
    $region30: #{attention_block.1} parent=5 // pred_check_branch
      %193 = sbr.rel (%p191) target = $region32
    $region31: #{attention_block.1} parent=5 // pred_region
      // Predicated region
      $region33: #{attention_block.1} parent=31 // pred_check
        %p194 = pneg %p45
      $region34: #{attention_block.1} parent=31 // pred_check_branch
        %196 = sbr.rel (%p194) target = $region36
      $region35: #{attention_block.1} parent=31 // pred_region
        %p197 = scmp.lt.s32.totalorder %s18, 1
        %s198 = scalar_select %p197, %s18, 1
        %p199 = scmp.lt.s32.totalorder %s19, 0
        %s200 = scalar_select %p199, %s19, 0
        %s201 = smul.addr %s198, 4
        %s202 = sadd.s32 %s200, %s201
        %s203 = smul.addr %s202, 8
        %s204 = scalar_lea.vmem %s0, %s203
      $region36: #{attention_block.1} parent=31 // pred_fallthru
        _
    $region32: #{attention_block.1} parent=5 // pred_fallthru
      _
    %p205 = scmp.le.s32.totalorder 1, %s11
    %p206 = scmp.lt.s32.totalorder %s11, 3
    %p207 = pnand %p205, %p206
    %p208 = pneg %p207
    // Predicated region
    $region37: #{attention_block.1} parent=5 // pred_check
      _
    $region38: #{attention_block.1} parent=5 // pred_check_branch
      %210 = sbr.rel (%p207) target = $region40
    $region39: #{attention_block.1} parent=5 // pred_region
      %s211 = ssub.s32 %s11, 1
      %p212 = scmp.lt.s32.totalorder %s20, 1
      %s213 = scalar_select %p212, %s20, 1
      %p214 = scmp.lt.s32.totalorder %s21, 0
      %s215 = scalar_select %p214, %s21, 0
      %s216 = smul.addr %s213, 4
      %s217 = sadd.s32 %s215, %s216
      %s218 = smul.addr %s217, 8
      %s219 = scalar_lea.vmem %s0, %s218
      %p220 = pneg %p51
      %p221 = pneg %p48
      %p222 = pneg %p72
      %p223 = pneg %p69
      %p224 = pneg %p93
      %p225 = pneg %p90
      %p226 = pneg %p114
      %p227 = pneg %p111
      %p228 = pneg %p135
      %p229 = pneg %p132
      %p230 = pneg %p163
      %p231 = pneg %p160
      %p232 = scmp.lt.s32.totalorder %s20, 1
      %s233 = scalar_select %p232, %s20, 1
      %p234 = scmp.lt.s32.totalorder %s21, 0
      %s235 = scalar_select %p234, %s21, 0
      %s236 = smul.addr %s233, 4
      %s237 = sadd.s32 %s235, %s236
      %s238 = smul.addr %s237, 8
      %s239 = scalar_lea.vmem %s5, %s238
      %p240 = scmp.lt.s32.totalorder %s20, 1
      %s241 = scalar_select %p240, %s20, 1
      %p242 = scmp.lt.s32.totalorder %s21, 0
      %s243 = scalar_select %p242, %s21, 0
      %s244 = smul.addr %s241, 4
      %s245 = sadd.s32 %s243, %s244
      %s246 = smul.addr %s245, 8
      %s247 = scalar_lea.vmem %s0, %s246
      %p248 = scmp.lt.s32.totalorder %s20, 1
      %s249 = scalar_select %p248, %s20, 1
      %p250 = scmp.lt.s32.totalorder %s21, 0
      %s251 = scalar_select %p250, %s21, 0
      %s252 = smul.addr %s249, 4
      %s253 = sadd.s32 %s251, %s252
      %s254 = smul.addr %s253, 8
      %s255 = scalar_lea.vmem %s5, %s254
      %v256 = vld [vmem:[%s1] sm:$0xff]
      %v257 = vld [vmem:[%s2] sm:$0xff]
      %v258 = vld [vmem:[%s3] sm:$0xff]
      %v259 = vld [vmem:[%s3 + $0x8] sm:$0xff]
      %v260 = vld [vmem:[%s3 + $0x10] sm:$0xff]
      %v261 = vld [vmem:[%s3 + $0x18] sm:$0xff]
      %v262 = vld [vmem:[%s4] sm:$0xff]
      %v263 = vld [vmem:[%s4 + $0x8] sm:$0xff]
      %v264 = vld [vmem:[%s4 + $0x10] sm:$0xff]
      %v265 = vld [vmem:[%s4 + $0x18] sm:$0xff]
      %v266 = vld [vmem:[%s247] sm:$0xff]
      %v267 = vld [vmem:[%s247 + $0x8] sm:$0xff]
      %v268 = vld [vmem:[%s247 + $0x10] sm:$0xff]
      %v269 = vld [vmem:[%s247 + $0x18] sm:$0xff]
      %271 = vset.pattern.permute.xlu0 0
      %272 = vperm.xlu0 %271, %v257
      %v273 = vpop.permute.xlu0 %272
      %vm275 = vcmask 261120
      %v277 = vsel %vm275, %v256, 0
      %279 = vmatprep.subr.mxu0 0.0
      %v280 = vand.u32 %v266, 4294901760
      %281 = vmatpush1.msra.mxu0 %v280
      %282 = vmatprep.subr.mxu0 0.0
      %v283 = vand.u32 %v267, 4294901760
      %284 = vmatpush1.msra.mxu0 %v283
      %285 = vmatprep.subr.mxu0 0.0
      %v286 = vand.u32 %v268, 4294901760
      %287 = vmatpush1.msra.mxu0 %v286
      %288 = vmatprep.subr.mxu0 0.0
      %v289 = vand.u32 %v269, 4294901760
      %290 = vmatpush1.msra.mxu0 %v289
      %291 = vmatprep.subr.mxu0 0.0
      %292 = vmatpush1.msra.mxu0 0.0
      %293 = vmatprep.subr.mxu0 0.0
      %294 = vmatpush1.msra.mxu0 0.0
      %295 = vmatprep.subr.mxu0 0.0
      %296 = vmatpush1.msra.mxu0 0.0
      %297 = vmatprep.subr.mxu0 0.0
      %298 = vmatpush1.msra.mxu0 0.0
      %299 = vmatprep.subr.mxu0 0.0
      %300 = vmatpush1.msra.mxu0 0.0
      %301 = vmatprep.subr.mxu0 0.0
      %302 = vmatpush1.msra.mxu0 0.0
      %303 = vmatprep.subr.mxu0 0.0
      %304 = vmatpush1.msra.mxu0 0.0
      %305 = vmatprep.subr.mxu0 0.0
      %306 = vmatpush1.msra.mxu0 0.0
      %307 = vmatprep.subr.mxu0 0.0
      %308 = vmatpush1.msra.mxu0 0.0
      %309 = vmatprep.subr.mxu0 0.0
      %310 = vmatpush1.msra.mxu0 0.0
      %311 = vmatprep.subr.mxu0 0.0
      %312 = vmatpush1.msra.mxu0 0.0
      %313 = vmatprep.subr.mxu0 0.0
      %314 = vmatpush1.msra.mxu0 0.0
      %315 = vmatprep.subr.mxu0 0.0
      %316 = vmatpush1.msra.mxu0 0.0
      %317 = vmatprep.subr.mxu0 0.0
      %318 = vmatpush1.msra.mxu0 0.0
      %319 = vmatprep.subr.mxu0 0.0
      %320 = vmatpush1.msra.mxu0 0.0
      %321 = vmatprep.subr.mxu0 0.0
      %322 = vmatpush1.msra.mxu0 0.0
      %323 = vmatprep.subr.mxu0 0.0
      %324 = vmatpush1.msra.mxu0 0.0
      %325 = vmatprep.subr.mxu0 0.0
      %326 = vmatpush1.msra.mxu0 0.0
      %327 = vmatprep.subr.mxu0 0.0
      %328 = vmatpush1.msra.mxu0 0.0
      %329 = vmatprep.subr.mxu0 0.0
      %330 = vmatpush1.msra.mxu0 0.0
      %331 = vmatprep.subr.mxu0 0.0
      %332 = vmatpush1.msra.mxu0 0.0
      %333 = vmatprep.subr.mxu0 0.0
      %334 = vmatpush1.msra.mxu0 0.0
      %335 = vmatprep.subr.mxu0 0.0
      %336 = vmatpush1.msra.mxu0 0.0
      %337 = vmatprep.subr.mxu0 0.0
      %338 = vmatpush1.msra.mxu0 0.0
      %339 = vmatprep.subr.mxu0 0.0
      %340 = vmatpush1.msra.mxu0 0.0
      %341 = vmatprep.subr.mxu0 0.0
      %342 = vmatpush1.msra.mxu0 0.0
      %343 = vmatprep.subr.mxu0 0.0
      %344 = vmatpush1.msra.mxu0 0.0
      %345 = vmatprep.subr.mxu0 0.0
      %346 = vmatpush1.msra.mxu0 0.0
      %347 = vmatprep.mubr.f32.mxu0 0.0
      %v348 = vand.u32 %v277, 4294901760
      %v349 = vsub.f32 %v277, %v348
      %v350 = vand.u32 %v349, 4294901760
      %v351 = vsub.f32 %v349, %v350
      %v352 = vand.u32 %v351, 4294901760
      %353 = vmatmul.mubr.f32.gmra.mrb[0].mxu0 %v352
      %v354 = vpop.f32.mrb[0].mxu0
      %v355 = vadd.f32 %v273, %v354
      %v356 = vpop.f32.mrb[0].mxu0
      %357 = vdwg.mxu0
      %358 = vmatprep.subr.mxu0 0.0
      %v359 = vand.u32 %v266, 4294901760
      %v360 = vsub.f32 %v266, %v359
      %v361 = vand.u32 %v360, 4294901760
      %v362 = vsub.f32 %v360, %v361
      %v363 = vand.u32 %v362, 4294901760
      %364 = vmatpush1.msra.mxu0 %v363
      %365 = vmatprep.subr.mxu0 0.0
      %v366 = vand.u32 %v267, 4294901760
      %v367 = vsub.f32 %v267, %v366
      %v368 = vand.u32 %v367, 4294901760
      %v369 = vsub.f32 %v367, %v368
      %v370 = vand.u32 %v369, 4294901760
      %371 = vmatpush1.msra.mxu0 %v370
      %372 = vmatprep.subr.mxu0 0.0
      %v373 = vand.u32 %v268, 4294901760
      %v374 = vsub.f32 %v268, %v373
      %v375 = vand.u32 %v374, 4294901760
      %v376 = vsub.f32 %v374, %v375
      %v377 = vand.u32 %v376, 4294901760
      %378 = vmatpush1.msra.mxu0 %v377
      %379 = vmatprep.subr.mxu0 0.0
      %v380 = vand.u32 %v269, 4294901760
      %v381 = vsub.f32 %v269, %v380
      %v382 = vand.u32 %v381, 4294901760
      %v383 = vsub.f32 %v381, %v382
      %v384 = vand.u32 %v383, 4294901760
      %385 = vmatpush1.msra.mxu0 %v384
      %386 = vmatprep.subr.mxu0 0.0
      %387 = vmatpush1.msra.mxu0 0.0
      %388 = vmatprep.subr.mxu0 0.0
      %389 = vmatpush1.msra.mxu0 0.0
      %390 = vmatprep.subr.mxu0 0.0
      %391 = vmatpush1.msra.mxu0 0.0
      %392 = vmatprep.subr.mxu0 0.0
      %393 = vmatpush1.msra.mxu0 0.0
      %394 = vmatprep.subr.mxu0 0.0
      %395 = vmatpush1.msra.mxu0 0.0
      %396 = vmatprep.subr.mxu0 0.0
      %397 = vmatpush1.msra.mxu0 0.0
      %398 = vmatprep.subr.mxu0 0.0
      %399 = vmatpush1.msra.mxu0 0.0
      %400 = vmatprep.subr.mxu0 0.0
      %401 = vmatpush1.msra.mxu0 0.0
      %402 = vmatprep.subr.mxu0 0.0
      %403 = vmatpush1.msra.mxu0 0.0
      %404 = vmatprep.subr.mxu0 0.0
      %405 = vmatpush1.msra.mxu0 0.0
      %406 = vmatprep.subr.mxu0 0.0
      %407 = vmatpush1.msra.mxu0 0.0
      %408 = vmatprep.subr.mxu0 0.0
      %409 = vmatpush1.msra.mxu0 0.0
      %410 = vmatprep.subr.mxu0 0.0
      %411 = vmatpush1.msra.mxu0 0.0
      %412 = vmatprep.subr.mxu0 0.0
      %413 = vmatpush1.msra.mxu0 0.0
      %414 = vmatprep.subr.mxu0 0.0
      %415 = vmatpush1.msra.mxu0 0.0
      %416 = vmatprep.subr.mxu0 0.0
      %417 = vmatpush1.msra.mxu0 0.0
      %418 = vmatprep.subr.mxu0 0.0
      %419 = vmatpush1.msra.mxu0 0.0
      %420 = vmatprep.subr.mxu0 0.0
      %421 = vmatpush1.msra.mxu0 0.0
      %422 = vmatprep.subr.mxu0 0.0
      %423 = vmatpush1.msra.mxu0 0.0
      %424 = vmatprep.subr.mxu0 0.0
      %425 = vmatpush1.msra.mxu0 0.0
      %426 = vmatprep.subr.mxu0 0.0
      %427 = vmatpush1.msra.mxu0 0.0
      %428 = vmatprep.subr.mxu0 0.0
      %429 = vmatpush1.msra.mxu0 0.0
      %430 = vmatprep.subr.mxu0 0.0
      %431 = vmatpush1.msra.mxu0 0.0
      %432 = vmatprep.subr.mxu0 0.0
      %433 = vmatpush1.msra.mxu0 0.0
      %434 = vmatprep.subr.mxu0 0.0
      %435 = vmatpush1.msra.mxu0 0.0
      %436 = vmatprep.subr.mxu0 0.0
      %437 = vmatpush1.msra.mxu0 0.0
      %438 = vmatprep.subr.mxu0 0.0
      %439 = vmatpush1.msra.mxu0 0.0
      %440 = vmatprep.subr.mxu0 0.0
      %441 = vmatpush1.msra.mxu0 0.0
      %442 = vmatprep.mubr.f32.mxu0 0.0
      %v443 = vand.u32 %v277, 4294901760
      %444 = vmatmul.mubr.f32.gmra.mrb[0].mxu0 %v443
      %v445 = vpop.f32.mrb[0].mxu0
      %v446 = vadd.f32 %v355, %v445
      %v447 = vpop.f32.mrb[0].mxu0
      %448 = vdwg.mxu0
      %449 = vmatprep.subr.mxu0 0.0
      %v450 = vand.u32 %v266, 4294901760
      %v451 = vsub.f32 %v266, %v450
      %452 = vmatpush1.msra.mxu0 %v451
      %453 = vmatprep.subr.mxu0 0.0
      %v454 = vand.u32 %v267, 4294901760
      %v455 = vsub.f32 %v267, %v454
      %456 = vmatpush1.msra.mxu0 %v455
      %457 = vmatprep.subr.mxu0 0.0
      %v458 = vand.u32 %v268, 4294901760
      %v459 = vsub.f32 %v268, %v458
      %460 = vmatpush1.msra.mxu0 %v459
      %461 = vmatprep.subr.mxu0 0.0
      %v462 = vand.u32 %v269, 4294901760
      %v463 = vsub.f32 %v269, %v462
      %464 = vmatpush1.msra.mxu0 %v463
      %465 = vmatprep.subr.mxu0 0.0
      %466 = vmatpush1.msra.mxu0 0.0
      %467 = vmatprep.subr.mxu0 0.0
      %468 = vmatpush1.msra.mxu0 0.0
      %469 = vmatprep.subr.mxu0 0.0
      %470 = vmatpush1.msra.mxu0 0.0
      %471 = vmatprep.subr.mxu0 0.0
      %472 = vmatpush1.msra.mxu0 0.0
      %473 = vmatprep.subr.mxu0 0.0
      %474 = vmatpush1.msra.mxu0 0.0
      %475 = vmatprep.subr.mxu0 0.0
      %476 = vmatpush1.msra.mxu0 0.0
      %477 = vmatprep.subr.mxu0 0.0
      %478 = vmatpush1.msra.mxu0 0.0
      %479 = vmatprep.subr.mxu0 0.0
      %480 = vmatpush1.msra.mxu0 0.0
      %481 = vmatprep.subr.mxu0 0.0
      %482 = vmatpush1.msra.mxu0 0.0
      %483 = vmatprep.subr.mxu0 0.0
      %484 = vmatpush1.msra.mxu0 0.0
      %485 = vmatprep.subr.mxu0 0.0
      %486 = vmatpush1.msra.mxu0 0.0
      %487 = vmatprep.subr.mxu0 0.0
      %488 = vmatpush1.msra.mxu0 0.0
      %489 = vmatprep.subr.mxu0 0.0
      %490 = vmatpush1.msra.mxu0 0.0
      %491 = vmatprep.subr.mxu0 0.0
      %492 = vmatpush1.msra.mxu0 0.0
      %493 = vmatprep.subr.mxu0 0.0
      %494 = vmatpush1.msra.mxu0 0.0
      %495 = vmatprep.subr.mxu0 0.0
      %496 = vmatpush1.msra.mxu0 0.0
      %497 = vmatprep.subr.mxu0 0.0
      %498 = vmatpush1.msra.mxu0 0.0
      %499 = vmatprep.subr.mxu0 0.0
      %500 = vmatpush1.msra.mxu0 0.0
      %501 = vmatprep.subr.mxu0 0.0
      %502 = vmatpush1.msra.mxu0 0.0
      %503 = vmatprep.subr.mxu0 0.0
      %504 = vmatpush1.msra.mxu0 0.0
      %505 = vmatprep.subr.mxu0 0.0
      %506 = vmatpush1.msra.mxu0 0.0
      %507 = vmatprep.subr.mxu0 0.0
      %508 = vmatpush1.msra.mxu0 0.0
      %509 = vmatprep.subr.mxu0 0.0
      %510 = vmatpush1.msra.mxu0 0.0
      %511 = vmatprep.subr.mxu0 0.0
      %512 = vmatpush1.msra.mxu0 0.0
      %513 = vmatprep.subr.mxu0 0.0
      %514 = vmatpush1.msra.mxu0 0.0
      %515 = vmatprep.subr.mxu0 0.0
      %516 = vmatpush1.msra.mxu0 0.0
      %517 = vmatprep.subr.mxu0 0.0
      %518 = vmatpush1.msra.mxu0 0.0
      %519 = vmatprep.subr.mxu0 0.0
      %520 = vmatpush1.msra.mxu0 0.0
      %521 = vmatprep.mubr.f32.mxu0 0.0
      %v522 = vand.u32 %v277, 4294901760
      %v523 = vsub.f32 %v277, %v522
      %524 = vmatmul.mubr.f32.gmra.mrb[0].mxu0 %v523
      %v525 = vpop.f32.mrb[0].mxu0
      %v526 = vadd.f32 %v446, %v525
      %v527 = vpop.f32.mrb[0].mxu0
      %528 = vdwg.mxu0
      %529 = vmatprep.subr.mxu0 0.0
      %v530 = vand.u32 %v266, 4294901760
      %531 = vmatpush1.msra.mxu0 %v530
      %532 = vmatprep.subr.mxu0 0.0
      %v533 = vand.u32 %v267, 4294901760
      %534 = vmatpush1.msra.mxu0 %v533
      %535 = vmatprep.subr.mxu0 0.0
      %v536 = vand.u32 %v268, 4294901760
      %537 = vmatpush1.msra.mxu0 %v536
      %538 = vmatprep.subr.mxu0 0.0
      %v539 = vand.u32 %v269, 4294901760
      %540 = vmatpush1.msra.mxu0 %v539
      %541 = vmatprep.subr.mxu0 0.0
      %542 = vmatpush1.msra.mxu0 0.0
      %543 = vmatprep.subr.mxu0 0.0
      %544 = vmatpush1.msra.mxu0 0.0
      %545 = vmatprep.subr.mxu0 0.0
      %546 = vmatpush1.msra.mxu0 0.0
      %547 = vmatprep.subr.mxu0 0.0
      %548 = vmatpush1.msra.mxu0 0.0
      %549 = vmatprep.subr.mxu0 0.0
      %550 = vmatpush1.msra.mxu0 0.0
      %551 = vmatprep.subr.mxu0 0.0
      %552 = vmatpush1.msra.mxu0 0.0
      %553 = vmatprep.subr.mxu0 0.0
      %554 = vmatpush1.msra.mxu0 0.0
      %555 = vmatprep.subr.mxu0 0.0
      %556 = vmatpush1.msra.mxu0 0.0
      %557 = vmatprep.subr.mxu0 0.0
      %558 = vmatpush1.msra.mxu0 0.0
      %559 = vmatprep.subr.mxu0 0.0
      %560 = vmatpush1.msra.mxu0 0.0
      %561 = vmatprep.subr.mxu0 0.0
      %562 = vmatpush1.msra.mxu0 0.0
      %563 = vmatprep.subr.mxu0 0.0
      %564 = vmatpush1.msra.mxu0 0.0
      %565 = vmatprep.subr.mxu0 0.0
      %566 = vmatpush1.msra.mxu0 0.0
      %567 = vmatprep.subr.mxu0 0.0
      %568 = vmatpush1.msra.mxu0 0.0
      %569 = vmatprep.subr.mxu0 0.0
      %570 = vmatpush1.msra.mxu0 0.0
      %571 = vmatprep.subr.mxu0 0.0
      %572 = vmatpush1.msra.mxu0 0.0
      %573 = vmatprep.subr.mxu0 0.0
      %574 = vmatpush1.msra.mxu0 0.0
      %575 = vmatprep.subr.mxu0 0.0
      %576 = vmatpush1.msra.mxu0 0.0
      %577 = vmatprep.subr.mxu0 0.0
      %578 = vmatpush1.msra.mxu0 0.0
      %579 = vmatprep.subr.mxu0 0.0
      %580 = vmatpush1.msra.mxu0 0.0
      %581 = vmatprep.subr.mxu0 0.0
      %582 = vmatpush1.msra.mxu0 0.0
      %583 = vmatprep.subr.mxu0 0.0
      %584 = vmatpush1.msra.mxu0 0.0
      %585 = vmatprep.subr.mxu0 0.0
      %586 = vmatpush1.msra.mxu0 0.0
      %587 = vmatprep.subr.mxu0 0.0
      %588 = vmatpush1.msra.mxu0 0.0
      %589 = vmatprep.subr.mxu0 0.0
      %590 = vmatpush1.msra.mxu0 0.0
      %591 = vmatprep.subr.mxu0 0.0
      %592 = vmatpush1.msra.mxu0 0.0
      %593 = vmatprep.subr.mxu0 0.0
      %594 = vmatpush1.msra.mxu0 0.0
      %595 = vmatprep.subr.mxu0 0.0
      %596 = vmatpush1.msra.mxu0 0.0
      %597 = vmatprep.mubr.f32.mxu0 0.0
      %v598 = vand.u32 %v277, 4294901760
      %v599 = vsub.f32 %v277, %v598
      %v600 = vand.u32 %v599, 4294901760
      %601 = vmatmul.mubr.f32.gmra.mrb[0].mxu0 %v600
      %v602 = vpop.f32.mrb[0].mxu0
      %v603 = vadd.f32 %v526, %v602
      %v604 = vpop.f32.mrb[0].mxu0
      %605 = vdwg.mxu0
      %606 = vmatprep.subr.mxu0 0.0
      %v607 = vand.u32 %v266, 4294901760
      %v608 = vsub.f32 %v266, %v607
      %v609 = vand.u32 %v608, 4294901760
      %610 = vmatpush1.msra.mxu0 %v609
      %611 = vmatprep.subr.mxu0 0.0
      %v612 = vand.u32 %v267, 4294901760
      %v613 = vsub.f32 %v267, %v612
      %v614 = vand.u32 %v613, 4294901760
      %615 = vmatpush1.msra.mxu0 %v614
      %616 = vmatprep.subr.mxu0 0.0
      %v617 = vand.u32 %v268, 4294901760
      %v618 = vsub.f32 %v268, %v617
      %v619 = vand.u32 %v618, 4294901760
      %620 = vmatpush1.msra.mxu0 %v619
      %621 = vmatprep.subr.mxu0 0.0
      %v622 = vand.u32 %v269, 4294901760
      %v623 = vsub.f32 %v269, %v622
      %v624 = vand.u32 %v623, 4294901760
      %625 = vmatpush1.msra.mxu0 %v624
      %626 = vmatprep.subr.mxu0 0.0
      %627 = vmatpush1.msra.mxu0 0.0
      %628 = vmatprep.subr.mxu0 0.0
      %629 = vmatpush1.msra.mxu0 0.0
      %630 = vmatprep.subr.mxu0 0.0
      %631 = vmatpush1.msra.mxu0 0.0
      %632 = vmatprep.subr.mxu0 0.0
      %633 = vmatpush1.msra.mxu0 0.0
      %634 = vmatprep.subr.mxu0 0.0
      %635 = vmatpush1.msra.mxu0 0.0
      %636 = vmatprep.subr.mxu0 0.0
      %637 = vmatpush1.msra.mxu0 0.0
      %638 = vmatprep.subr.mxu0 0.0
      %639 = vmatpush1.msra.mxu0 0.0
      %640 = vmatprep.subr.mxu0 0.0
      %641 = vmatpush1.msra.mxu0 0.0
      %642 = vmatprep.subr.mxu0 0.0
      %643 = vmatpush1.msra.mxu0 0.0
      %644 = vmatprep.subr.mxu0 0.0
      %645 = vmatpush1.msra.mxu0 0.0
      %646 = vmatprep.subr.mxu0 0.0
      %647 = vmatpush1.msra.mxu0 0.0
      %648 = vmatprep.subr.mxu0 0.0
      %649 = vmatpush1.msra.mxu0 0.0
      %650 = vmatprep.subr.mxu0 0.0
      %651 = vmatpush1.msra.mxu0 0.0
      %652 = vmatprep.subr.mxu0 0.0
      %653 = vmatpush1.msra.mxu0 0.0
      %654 = vmatprep.subr.mxu0 0.0
      %655 = vmatpush1.msra.mxu0 0.0
      %656 = vmatprep.subr.mxu0 0.0
      %657 = vmatpush1.msra.mxu0 0.0
      %658 = vmatprep.subr.mxu0 0.0
      %659 = vmatpush1.msra.mxu0 0.0
      %660 = vmatprep.subr.mxu0 0.0
      %661 = vmatpush1.msra.mxu0 0.0
      %662 = vmatprep.subr.mxu0 0.0
      %663 = vmatpush1.msra.mxu0 0.0
      %664 = vmatprep.subr.mxu0 0.0
      %665 = vmatpush1.msra.mxu0 0.0
      %666 = vmatprep.subr.mxu0 0.0
      %667 = vmatpush1.msra.mxu0 0.0
      %668 = vmatprep.subr.mxu0 0.0
      %669 = vmatpush1.msra.mxu0 0.0
      %670 = vmatprep.subr.mxu0 0.0
      %671 = vmatpush1.msra.mxu0 0.0
      %672 = vmatprep.subr.mxu0 0.0
      %673 = vmatpush1.msra.mxu0 0.0
      %674 = vmatprep.subr.mxu0 0.0
      %675 = vmatpush1.msra.mxu0 0.0
      %676 = vmatprep.subr.mxu0 0.0
      %677 = vmatpush1.msra.mxu0 0.0
      %678 = vmatprep.subr.mxu0 0.0
      %679 = vmatpush1.msra.mxu0 0.0
      %680 = vmatprep.subr.mxu0 0.0
      %681 = vmatpush1.msra.mxu0 0.0
      %682 = vmatprep.mubr.f32.mxu0 0.0
      %v683 = vand.u32 %v277, 4294901760
      %684 = vmatmul.mubr.f32.gmra.mrb[0].mxu0 %v683
      %v685 = vpop.f32.mrb[0].mxu0
      %v686 = vadd.f32 %v603, %v685
      %v687 = vpop.f32.mrb[0].mxu0
      %688 = vdwg.mxu0
      %689 = vmatprep.subr.mxu0 0.0
      %v690 = vand.u32 %v266, 4294901760
      %691 = vmatpush1.msra.mxu0 %v690
      %692 = vmatprep.subr.mxu0 0.0
      %v693 = vand.u32 %v267, 4294901760
      %694 = vmatpush1.msra.mxu0 %v693
      %695 = vmatprep.subr.mxu0 0.0
      %v696 = vand.u32 %v268, 4294901760
      %697 = vmatpush1.msra.mxu0 %v696
      %698 = vmatprep.subr.mxu0 0.0
      %v699 = vand.u32 %v269, 4294901760
      %700 = vmatpush1.msra.mxu0 %v699
      %701 = vmatprep.subr.mxu0 0.0
      %702 = vmatpush1.msra.mxu0 0.0
      %703 = vmatprep.subr.mxu0 0.0
      %704 = vmatpush1.msra.mxu0 0.0
      %705 = vmatprep.subr.mxu0 0.0
      %706 = vmatpush1.msra.mxu0 0.0
      %707 = vmatprep.subr.mxu0 0.0
      %708 = vmatpush1.msra.mxu0 0.0
      %709 = vmatprep.subr.mxu0 0.0
      %710 = vmatpush1.msra.mxu0 0.0
      %711 = vmatprep.subr.mxu0 0.0
      %712 = vmatpush1.msra.mxu0 0.0
      %713 = vmatprep.subr.mxu0 0.0
      %714 = vmatpush1.msra.mxu0 0.0
      %715 = vmatprep.subr.mxu0 0.0
      %716 = vmatpush1.msra.mxu0 0.0
      %717 = vmatprep.subr.mxu0 0.0
      %718 = vmatpush1.msra.mxu0 0.0
      %719 = vmatprep.subr.mxu0 0.0
      %720 = vmatpush1.msra.mxu0 0.0
      %721 = vmatprep.subr.mxu0 0.0
      %722 = vmatpush1.msra.mxu0 0.0
      %723 = vmatprep.subr.mxu0 0.0
      %724 = vmatpush1.msra.mxu0 0.0
      %725 = vmatprep.subr.mxu0 0.0
      %726 = vmatpush1.msra.mxu0 0.0
      %727 = vmatprep.subr.mxu0 0.0
      %728 = vmatpush1.msra.mxu0 0.0
      %729 = vmatprep.subr.mxu0 0.0
      %730 = vmatpush1.msra.mxu0 0.0
      %731 = vmatprep.subr.mxu0 0.0
      %732 = vmatpush1.msra.mxu0 0.0
      %733 = vmatprep.subr.mxu0 0.0
      %734 = vmatpush1.msra.mxu0 0.0
      %735 = vmatprep.subr.mxu0 0.0
      %736 = vmatpush1.msra.mxu0 0.0
      %737 = vmatprep.subr.mxu0 0.0
      %738 = vmatpush1.msra.mxu0 0.0
      %739 = vmatprep.subr.mxu0 0.0
      %740 = vmatpush1.msra.mxu0 0.0
      %741 = vmatprep.subr.mxu0 0.0
      %742 = vmatpush1.msra.mxu0 0.0
      %743 = vmatprep.subr.mxu0 0.0
      %744 = vmatpush1.msra.mxu0 0.0
      %745 = vmatprep.subr.mxu0 0.0
      %746 = vmatpush1.msra.mxu0 0.0
      %747 = vmatprep.subr.mxu0 0.0
      %748 = vmatpush1.msra.mxu0 0.0
      %749 = vmatprep.subr.mxu0 0.0
      %750 = vmatpush1.msra.mxu0 0.0
      %751 = vmatprep.subr.mxu0 0.0
      %752 = vmatpush1.msra.mxu0 0.0
      %753 = vmatprep.subr.mxu0 0.0
      %754 = vmatpush1.msra.mxu0 0.0
      %755 = vmatprep.subr.mxu0 0.0
      %756 = vmatpush1.msra.mxu0 0.0
      %757 = vmatprep.mubr.f32.mxu0 0.0
      %v758 = vand.u32 %v277, 4294901760
      %759 = vmatmul.mubr.f32.gmra.mrb[0].mxu0 %v758
      %v760 = vpop.f32.mrb[0].mxu0
      %v761 = vadd.f32 %v686, %v760
      %v762 = vpop.f32.mrb[0].mxu0
      %763 = vdwg.mxu0
      %v764 = vmax.f32 %v761, 0.0
      %766 = vset.pattern.permute.xlu0 0
      %767 = vperm.xlu0 %766, %v262
      %v768 = vpop.permute.xlu0 %767
      %771 = vset.pattern.permute.xlu0 0
      %772 = vperm.xlu0 %771, %v263
      %v773 = vpop.permute.xlu0 %772
      %776 = vset.pattern.permute.xlu0 0
      %777 = vperm.xlu0 %776, %v264
      %v778 = vpop.permute.xlu0 %777
      %781 = vset.pattern.permute.xlu0 0
      %782 = vperm.xlu0 %781, %v265
      %v783 = vpop.permute.xlu0 %782
      %vm785 = vcmask 64512
      %v787 = vsel %vm785, %v258, 0
      %v790 = vsel %vm785, %v259, 0
      %v793 = vsel %vm785, %v260, 0
      %v796 = vsel %vm785, %v261, 0
      %798 = vmatprep.subr.mxu0 0.0
      %v799 = vand.u32 %v764, 4294901760
      %800 = vmatpush1.msra.mxu0 %v799
      %801 = vmatprep.subr.mxu0 0.0
      %802 = vmatpush1.msra.mxu0 0.0
      %803 = vmatprep.subr.mxu0 0.0
      %804 = vmatpush1.msra.mxu0 0.0
      %805 = vmatprep.subr.mxu0 0.0
      %806 = vmatpush1.msra.mxu0 0.0
      %807 = vmatprep.subr.mxu0 0.0
      %808 = vmatpush1.msra.mxu0 0.0
      %809 = vmatprep.subr.mxu0 0.0
      %810 = vmatpush1.msra.mxu0 0.0
      %811 = vmatprep.subr.mxu0 0.0
      %812 = vmatpush1.msra.mxu0 0.0
      %813 = vmatprep.subr.mxu0 0.0
      %814 = vmatpush1.msra.mxu0 0.0
      %815 = vmatprep.subr.mxu0 0.0
      %816 = vmatpush1.msra.mxu0 0.0
      %817 = vmatprep.subr.mxu0 0.0
      %818 = vmatpush1.msra.mxu0 0.0
      %819 = vmatprep.subr.mxu0 0.0
      %820 = vmatpush1.msra.mxu0 0.0
      %821 = vmatprep.subr.mxu0 0.0
      %822 = vmatpush1.msra.mxu0 0.0
      %823 = vmatprep.subr.mxu0 0.0
      %824 = vmatpush1.msra.mxu0 0.0
      %825 = vmatprep.subr.mxu0 0.0
      %826 = vmatpush1.msra.mxu0 0.0
      %827 = vmatprep.subr.mxu0 0.0
      %828 = vmatpush1.msra.mxu0 0.0
      %829 = vmatprep.subr.mxu0 0.0
      %830 = vmatpush1.msra.mxu0 0.0
      %831 = vmatprep.subr.mxu0 0.0
      %832 = vmatpush1.msra.mxu0 0.0
      %833 = vmatprep.subr.mxu0 0.0
      %834 = vmatpush1.msra.mxu0 0.0
      %835 = vmatprep.subr.mxu0 0.0
      %836 = vmatpush1.msra.mxu0 0.0
      %837 = vmatprep.subr.mxu0 0.0
      %838 = vmatpush1.msra.mxu0 0.0
      %839 = vmatprep.subr.mxu0 0.0
      %840 = vmatpush1.msra.mxu0 0.0
      %841 = vmatprep.subr.mxu0 0.0
      %842 = vmatpush1.msra.mxu0 0.0
      %843 = vmatprep.subr.mxu0 0.0
      %844 = vmatpush1.msra.mxu0 0.0
      %845 = vmatprep.subr.mxu0 0.0
      %846 = vmatpush1.msra.mxu0 0.0
      %847 = vmatprep.subr.mxu0 0.0
      %848 = vmatpush1.msra.mxu0 0.0
      %849 = vmatprep.subr.mxu0 0.0
      %850 = vmatpush1.msra.mxu0 0.0
      %851 = vmatprep.subr.mxu0 0.0
      %852 = vmatpush1.msra.mxu0 0.0
      %853 = vmatprep.subr.mxu0 0.0
      %854 = vmatpush1.msra.mxu0 0.0
      %855 = vmatprep.subr.mxu0 0.0
      %856 = vmatpush1.msra.mxu0 0.0
      %857 = vmatprep.subr.mxu0 0.0
      %858 = vmatpush1.msra.mxu0 0.0
      %859 = vmatprep.subr.mxu0 0.0
      %860 = vmatpush1.msra.mxu0 0.0
      %861 = vmatprep.subr.mxu0 0.0
      %862 = vmatpush1.msra.mxu0 0.0
      %863 = vmatprep.mubr.f32.mxu0 0.0
      %v864 = vand.u32 %v787, 4294901760
      %v865 = vsub.f32 %v787, %v864
      %v866 = vand.u32 %v865, 4294901760
      %v867 = vsub.f32 %v865, %v866
      %v868 = vand.u32 %v867, 4294901760
      %869 = vmatmul.mubr.f32.gmra.mrb[0].mxu0 %v868
      %v870 = vpop.f32.mrb[0].mxu0
      %v871 = vadd.f32 %v768, %v870
      %v872 = vpop.f32.mrb[0].mxu0
      %873 = vmatprep.mubr.f32.mxu0 0.0
      %v874 = vand.u32 %v790, 4294901760
      %v875 = vsub.f32 %v790, %v874
      %v876 = vand.u32 %v875, 4294901760
      %v877 = vsub.f32 %v875, %v876
      %v878 = vand.u32 %v877, 4294901760
      %879 = vmatmul.mubr.f32.gmra.mrb[0].mxu0 %v878
      %v880 = vpop.f32.mrb[0].mxu0
      %v881 = vadd.f32 %v773, %v880
      %v882 = vpop.f32.mrb[0].mxu0
      %883 = vmatprep.mubr.f32.mxu0 0.0
      %v884 = vand.u32 %v793, 4294901760
      %v885 = vsub.f32 %v793, %v884
      %v886 = vand.u32 %v885, 4294901760
      %v887 = vsub.f32 %v885, %v886
      %v888 = vand.u32 %v887, 4294901760
      %889 = vmatmul.mubr.f32.gmra.mrb[0].mxu0 %v888
      %v890 = vpop.f32.mrb[0].mxu0
      %v891 = vadd.f32 %v778, %v890
      %v892 = vpop.f32.mrb[0].mxu0
      %893 = vmatprep.mubr.f32.mxu0 0.0
      %v894 = vand.u32 %v796, 4294901760
      %v895 = vsub.f32 %v796, %v894
      %v896 = vand.u32 %v895, 4294901760
      %v897 = vsub.f32 %v895, %v896
      %v898 = vand.u32 %v897, 4294901760
      %899 = vmatmul.mubr.f32.gmra.mrb[0].mxu0 %v898
      %v900 = vpop.f32.mrb[0].mxu0
      %v901 = vadd.f32 %v783, %v900
      %v902 = vpop.f32.mrb[0].mxu0
      %903 = vdwg.mxu0
      %904 = vmatprep.subr.mxu0 0.0
      %v905 = vand.u32 %v764, 4294901760
      %v906 = vsub.f32 %v764, %v905
      %v907 = vand.u32 %v906, 4294901760
      %v908 = vsub.f32 %v906, %v907
      %v909 = vand.u32 %v908, 4294901760
      %910 = vmatpush1.msra.mxu0 %v909
      %911 = vmatprep.subr.mxu0 0.0
      %912 = vmatpush1.msra.mxu0 0.0
      %913 = vmatprep.subr.mxu0 0.0
      %914 = vmatpush1.msra.mxu0 0.0
      %915 = vmatprep.subr.mxu0 0.0
      %916 = vmatpush1.msra.mxu0 0.0
      %917 = vmatprep.subr.mxu0 0.0
      %918 = vmatpush1.msra.mxu0 0.0
      %919 = vmatprep.subr.mxu0 0.0
      %920 = vmatpush1.msra.mxu0 0.0
      %921 = vmatprep.subr.mxu0 0.0
      %922 = vmatpush1.msra.mxu0 0.0
      %923 = vmatprep.subr.mxu0 0.0
      %924 = vmatpush1.msra.mxu0 0.0
      %925 = vmatprep.subr.mxu0 0.0
      %926 = vmatpush1.msra.mxu0 0.0
      %927 = vmatprep.subr.mxu0 0.0
      %928 = vmatpush1.msra.mxu0 0.0
      %929 = vmatprep.subr.mxu0 0.0
      %930 = vmatpush1.msra.mxu0 0.0
      %931 = vmatprep.subr.mxu0 0.0
      %932 = vmatpush1.msra.mxu0 0.0
      %933 = vmatprep.subr.mxu0 0.0
      %934 = vmatpush1.msra.mxu0 0.0
      %935 = vmatprep.subr.mxu0 0.0
      %936 = vmatpush1.msra.mxu0 0.0
      %937 = vmatprep.subr.mxu0 0.0
      %938 = vmatpush1.msra.mxu0 0.0
      %939 = vmatprep.subr.mxu0 0.0
      %940 = vmatpush1.msra.mxu0 0.0
      %941 = vmatprep.subr.mxu0 0.0
      %942 = vmatpush1.msra.mxu0 0.0
      %943 = vmatprep.subr.mxu0 0.0
      %944 = vmatpush1.msra.mxu0 0.0
      %945 = vmatprep.subr.mxu0 0.0
      %946 = vmatpush1.msra.mxu0 0.0
      %947 = vmatprep.subr.mxu0 0.0
      %948 = vmatpush1.msra.mxu0 0.0
      %949 = vmatprep.subr.mxu0 0.0
      %950 = vmatpush1.msra.mxu0 0.0
      %951 = vmatprep.subr.mxu0 0.0
      %952 = vmatpush1.msra.mxu0 0.0
      %953 = vmatprep.subr.mxu0 0.0
      %954 = vmatpush1.msra.mxu0 0.0
      %955 = vmatprep.subr.mxu0 0.0
      %956 = vmatpush1.msra.mxu0 0.0
      %957 = vmatprep.subr.mxu0 0.0
      %958 = vmatpush1.msra.mxu0 0.0
      %959 = vmatprep.subr.mxu0 0.0
      %960 = vmatpush1.msra.mxu0 0.0
      %961 = vmatprep.subr.mxu0 0.0
      %962 = vmatpush1.msra.mxu0 0.0
      %963 = vmatprep.subr.mxu0 0.0
      %964 = vmatpush1.msra.mxu0 0.0
      %965 = vmatprep.subr.mxu0 0.0
      %966 = vmatpush1.msra.mxu0 0.0
      %967 = vmatprep.subr.mxu0 0.0
      %968 = vmatpush1.msra.mxu0 0.0
      %969 = vmatprep.subr.mxu0 0.0
      %970 = vmatpush1.msra.mxu0 0.0
      %971 = vmatprep.subr.mxu0 0.0
      %972 = vmatpush1.msra.mxu0 0.0
      %973 = vmatprep.mubr.f32.mxu0 0.0
      %v974 = vand.u32 %v787, 4294901760
      %975 = vmatmul.mubr.f32.gmra.mrb[0].mxu0 %v974
      %v976 = vpop.f32.mrb[0].mxu0
      %v977 = vadd.f32 %v871, %v976
      %v978 = vpop.f32.mrb[0].mxu0
      %979 = vmatprep.mubr.f32.mxu0 0.0
      %v980 = vand.u32 %v790, 4294901760
      %981 = vmatmul.mubr.f32.gmra.mrb[0].mxu0 %v980
      %v982 = vpop.f32.mrb[0].mxu0
      %v983 = vadd.f32 %v881, %v982
      %v984 = vpop.f32.mrb[0].mxu0
      %985 = vmatprep.mubr.f32.mxu0 0.0
      %v986 = vand.u32 %v793, 4294901760
      %987 = vmatmul.mubr.f32.gmra.mrb[0].mxu0 %v986
      %v988 = vpop.f32.mrb[0].mxu0
      %v989 = vadd.f32 %v891, %v988
      %v990 = vpop.f32.mrb[0].mxu0
      %991 = vmatprep.mubr.f32.mxu0 0.0
      %v992 = vand.u32 %v796, 4294901760
      %993 = vmatmul.mubr.f32.gmra.mrb[0].mxu0 %v992
      %v994 = vpop.f32.mrb[0].mxu0
      %v995 = vadd.f32 %v901, %v994
      %v996 = vpop.f32.mrb[0].mxu0
      %997 = vdwg.mxu0
      %998 = vmatprep.subr.mxu0 0.0
      %v999 = vand.u32 %v764, 4294901760
      %v1000 = vsub.f32 %v764, %v999
      %1001 = vmatpush1.msra.mxu0 %v1000
      %1002 = vmatprep.subr.mxu0 0.0
      %1003 = vmatpush1.msra.mxu0 0.0
      %1004 = vmatprep.subr.mxu0 0.0
      %1005 = vmatpush1.msra.mxu0 0.0
      %1006 = vmatprep.subr.mxu0 0.0
      %1007 = vmatpush1.msra.mxu0 0.0
      %1008 = vmatprep.subr.mxu0 0.0
      %1009 = vmatpush1.msra.mxu0 0.0
      %1010 = vmatprep.subr.mxu0 0.0
      %1011 = vmatpush1.msra.mxu0 0.0
      %1012 = vmatprep.subr.mxu0 0.0
      %1013 = vmatpush1.msra.mxu0 0.0
      %1014 = vmatprep.subr.mxu0 0.0
      %1015 = vmatpush1.msra.mxu0 0.0
      %1016 = vmatprep.subr.mxu0 0.0
      %1017 = vmatpush1.msra.mxu0 0.0
      %1018 = vmatprep.subr.mxu0 0.0
      %1019 = vmatpush1.msra.mxu0 0.0
      %1020 = vmatprep.subr.mxu0 0.0
      %1021 = vmatpush1.msra.mxu0 0.0
      %1022 = vmatprep.subr.mxu0 0.0
      %1023 = vmatpush1.msra.mxu0 0.0
      %1024 = vmatprep.subr.mxu0 0.0
      %1025 = vmatpush1.msra.mxu0 0.0
      %1026 = vmatprep.subr.mxu0 0.0
      %1027 = vmatpush1.msra.mxu0 0.0
      %1028 = vmatprep.subr.mxu0 0.0
      %1029 = vmatpush1.msra.mxu0 0.0
      %1030 = vmatprep.subr.mxu0 0.0
      %1031 = vmatpush1.msra.mxu0 0.0
      %1032 = vmatprep.subr.mxu0 0.0
      %1033 = vmatpush1.msra.mxu0 0.0
      %1034 = vmatprep.subr.mxu0 0.0
      %1035 = vmatpush1.msra.mxu0 0.0
      %1036 = vmatprep.subr.mxu0 0.0
      %1037 = vmatpush1.msra.mxu0 0.0
      %1038 = vmatprep.subr.mxu0 0.0
      %1039 = vmatpush1.msra.mxu0 0.0
      %1040 = vmatprep.subr.mxu0 0.0
      %1041 = vmatpush1.msra.mxu0 0.0
      %1042 = vmatprep.subr.mxu0 0.0
      %1043 = vmatpush1.msra.mxu0 0.0
      %1044 = vmatprep.subr.mxu0 0.0
      %1045 = vmatpush1.msra.mxu0 0.0
      %1046 = vmatprep.subr.mxu0 0.0
      %1047 = vmatpush1.msra.mxu0 0.0
      %1048 = vmatprep.subr.mxu0 0.0
      %1049 = vmatpush1.msra.mxu0 0.0
      %1050 = vmatprep.subr.mxu0 0.0
      %1051 = vmatpush1.msra.mxu0 0.0
      %1052 = vmatprep.subr.mxu0 0.0
      %1053 = vmatpush1.msra.mxu0 0.0
      %1054 = vmatprep.subr.mxu0 0.0
      %1055 = vmatpush1.msra.mxu0 0.0
      %1056 = vmatprep.subr.mxu0 0.0
      %1057 = vmatpush1.msra.mxu0 0.0
      %1058 = vmatprep.subr.mxu0 0.0
      %1059 = vmatpush1.msra.mxu0 0.0
      %1060 = vmatprep.subr.mxu0 0.0
      %1061 = vmatpush1.msra.mxu0 0.0
      %1062 = vmatprep.subr.mxu0 0.0
      %1063 = vmatpush1.msra.mxu0 0.0
      %1064 = vmatprep.mubr.f32.mxu0 0.0
      %v1065 = vand.u32 %v787, 4294901760
      %v1066 = vsub.f32 %v787, %v1065
      %1067 = vmatmul.mubr.f32.gmra.mrb[0].mxu0 %v1066
      %v1068 = vpop.f32.mrb[0].mxu0
      %v1069 = vadd.f32 %v977, %v1068
      %v1070 = vpop.f32.mrb[0].mxu0
      %1071 = vmatprep.mubr.f32.mxu0 0.0
      %v1072 = vand.u32 %v790, 4294901760
      %v1073 = vsub.f32 %v790, %v1072
      %1074 = vmatmul.mubr.f32.gmra.mrb[0].mxu0 %v1073
      %v1075 = vpop.f32.mrb[0].mxu0
      %v1076 = vadd.f32 %v983, %v1075
      %v1077 = vpop.f32.mrb[0].mxu0
      %1078 = vmatprep.mubr.f32.mxu0 0.0
      %v1079 = vand.u32 %v793, 4294901760
      %v1080 = vsub.f32 %v793, %v1079
      %1081 = vmatmul.mubr.f32.gmra.mrb[0].mxu0 %v1080
      %v1082 = vpop.f32.mrb[0].mxu0
      %v1083 = vadd.f32 %v989, %v1082
      %v1084 = vpop.f32.mrb[0].mxu0
      %1085 = vmatprep.mubr.f32.mxu0 0.0
      %v1086 = vand.u32 %v796, 4294901760
      %v1087 = vsub.f32 %v796, %v1086
      %1088 = vmatmul.mubr.f32.gmra.mrb[0].mxu0 %v1087
      %v1089 = vpop.f32.mrb[0].mxu0
      %v1090 = vadd.f32 %v995, %v1089
      %v1091 = vpop.f32.mrb[0].mxu0
      %1092 = vdwg.mxu0
      %1093 = vmatprep.subr.mxu0 0.0
      %v1094 = vand.u32 %v764, 4294901760
      %1095 = vmatpush1.msra.mxu0 %v1094
      %1096 = vmatprep.subr.mxu0 0.0
      %1097 = vmatpush1.msra.mxu0 0.0
      %1098 = vmatprep.subr.mxu0 0.0
      %1099 = vmatpush1.msra.mxu0 0.0
      %1100 = vmatprep.subr.mxu0 0.0
      %1101 = vmatpush1.msra.mxu0 0.0
      %1102 = vmatprep.subr.mxu0 0.0
      %1103 = vmatpush1.msra.mxu0 0.0
      %1104 = vmatprep.subr.mxu0 0.0
      %1105 = vmatpush1.msra.mxu0 0.0
      %1106 = vmatprep.subr.mxu0 0.0
      %1107 = vmatpush1.msra.mxu0 0.0
      %1108 = vmatprep.subr.mxu0 0.0
      %1109 = vmatpush1.msra.mxu0 0.0
      %1110 = vmatprep.subr.mxu0 0.0
      %1111 = vmatpush1.msra.mxu0 0.0
      %1112 = vmatprep.subr.mxu0 0.0
      %1113 = vmatpush1.msra.mxu0 0.0
      %1114 = vmatprep.subr.mxu0 0.0
      %1115 = vmatpush1.msra.mxu0 0.0
      %1116 = vmatprep.subr.mxu0 0.0
      %1117 = vmatpush1.msra.mxu0 0.0
      %1118 = vmatprep.subr.mxu0 0.0
      %1119 = vmatpush1.msra.mxu0 0.0
      %1120 = vmatprep.subr.mxu0 0.0
      %1121 = vmatpush1.msra.mxu0 0.0
      %1122 = vmatprep.subr.mxu0 0.0
      %1123 = vmatpush1.msra.mxu0 0.0
      %1124 = vmatprep.subr.mxu0 0.0
      %1125 = vmatpush1.msra.mxu0 0.0
      %1126 = vmatprep.subr.mxu0 0.0
      %1127 = vmatpush1.msra.mxu0 0.0
      %1128 = vmatprep.subr.mxu0 0.0
      %1129 = vmatpush1.msra.mxu0 0.0
      %1130 = vmatprep.subr.mxu0 0.0
      %1131 = vmatpush1.msra.mxu0 0.0
      %1132 = vmatprep.subr.mxu0 0.0
      %1133 = vmatpush1.msra.mxu0 0.0
      %1134 = vmatprep.subr.mxu0 0.0
      %1135 = vmatpush1.msra.mxu0 0.0
      %1136 = vmatprep.subr.mxu0 0.0
      %1137 = vmatpush1.msra.mxu0 0.0
      %1138 = vmatprep.subr.mxu0 0.0
      %1139 = vmatpush1.msra.mxu0 0.0
      %1140 = vmatprep.subr.mxu0 0.0
      %1141 = vmatpush1.msra.mxu0 0.0
      %1142 = vmatprep.subr.mxu0 0.0
      %1143 = vmatpush1.msra.mxu0 0.0
      %1144 = vmatprep.subr.mxu0 0.0
      %1145 = vmatpush1.msra.mxu0 0.0
      %1146 = vmatprep.subr.mxu0 0.0
      %1147 = vmatpush1.msra.mxu0 0.0
      %1148 = vmatprep.subr.mxu0 0.0
      %1149 = vmatpush1.msra.mxu0 0.0
      %1150 = vmatprep.subr.mxu0 0.0
      %1151 = vmatpush1.msra.mxu0 0.0
      %1152 = vmatprep.subr.mxu0 0.0
      %1153 = vmatpush1.msra.mxu0 0.0
      %1154 = vmatprep.subr.mxu0 0.0
      %1155 = vmatpush1.msra.mxu0 0.0
      %1156 = vmatprep.subr.mxu0 0.0
      %1157 = vmatpush1.msra.mxu0 0.0
      %1158 = vmatprep.mubr.f32.mxu0 0.0
      %v1159 = vand.u32 %v787, 4294901760
      %v1160 = vsub.f32 %v787, %v1159
      %v1161 = vand.u32 %v1160, 4294901760
      %1162 = vmatmul.mubr.f32.gmra.mrb[0].mxu0 %v1161
      %v1163 = vpop.f32.mrb[0].mxu0
      %v1164 = vadd.f32 %v1069, %v1163
      %v1165 = vpop.f32.mrb[0].mxu0
      %1166 = vmatprep.mubr.f32.mxu0 0.0
      %v1167 = vand.u32 %v790, 4294901760
      %v1168 = vsub.f32 %v790, %v1167
      %v1169 = vand.u32 %v1168, 4294901760
      %1170 = vmatmul.mubr.f32.gmra.mrb[0].mxu0 %v1169
      %v1171 = vpop.f32.mrb[0].mxu0
      %v1172 = vadd.f32 %v1076, %v1171
      %v1173 = vpop.f32.mrb[0].mxu0
      %1174 = vmatprep.mubr.f32.mxu0 0.0
      %v1175 = vand.u32 %v793, 4294901760
      %v1176 = vsub.f32 %v793, %v1175
      %v1177 = vand.u32 %v1176, 4294901760
      %1178 = vmatmul.mubr.f32.gmra.mrb[0].mxu0 %v1177
      %v1179 = vpop.f32.mrb[0].mxu0
      %v1180 = vadd.f32 %v1083, %v1179
      %v1181 = vpop.f32.mrb[0].mxu0
      %1182 = vmatprep.mubr.f32.mxu0 0.0
      %v1183 = vand.u32 %v796, 4294901760
      %v1184 = vsub.f32 %v796, %v1183
      %v1185 = vand.u32 %v1184, 4294901760
      %1186 = vmatmul.mubr.f32.gmra.mrb[0].mxu0 %v1185
      %v1187 = vpop.f32.mrb[0].mxu0
      %v1188 = vadd.f32 %v1090, %v1187
      %v1189 = vpop.f32.mrb[0].mxu0
      %1190 = vdwg.mxu0
      %1191 = vmatprep.subr.mxu0 0.0
      %v1192 = vand.u32 %v764, 4294901760
      %v1193 = vsub.f32 %v764, %v1192
      %v1194 = vand.u32 %v1193, 4294901760
      %1195 = vmatpush1.msra.mxu0 %v1194
      %1196 = vmatprep.subr.mxu0 0.0
      %1197 = vmatpush1.msra.mxu0 0.0
      %1198 = vmatprep.subr.mxu0 0.0
      %1199 = vmatpush1.msra.mxu0 0.0
      %1200 = vmatprep.subr.mxu0 0.0
      %1201 = vmatpush1.msra.mxu0 0.0
      %1202 = vmatprep.subr.mxu0 0.0
      %1203 = vmatpush1.msra.mxu0 0.0
      %1204 = vmatprep.subr.mxu0 0.0
      %1205 = vmatpush1.msra.mxu0 0.0
      %1206 = vmatprep.subr.mxu0 0.0
      %1207 = vmatpush1.msra.mxu0 0.0
      %1208 = vmatprep.subr.mxu0 0.0
      %1209 = vmatpush1.msra.mxu0 0.0
      %1210 = vmatprep.subr.mxu0 0.0
      %1211 = vmatpush1.msra.mxu0 0.0
      %1212 = vmatprep.subr.mxu0 0.0
      %1213 = vmatpush1.msra.mxu0 0.0
      %1214 = vmatprep.subr.mxu0 0.0
      %1215 = vmatpush1.msra.mxu0 0.0
      %1216 = vmatprep.subr.mxu0 0.0
      %1217 = vmatpush1.msra.mxu0 0.0
      %1218 = vmatprep.subr.mxu0 0.0
      %1219 = vmatpush1.msra.mxu0 0.0
      %1220 = vmatprep.subr.mxu0 0.0
      %1221 = vmatpush1.msra.mxu0 0.0
      %1222 = vmatprep.subr.mxu0 0.0
      %1223 = vmatpush1.msra.mxu0 0.0
      %1224 = vmatprep.subr.mxu0 0.0
      %1225 = vmatpush1.msra.mxu0 0.0
      %1226 = vmatprep.subr.mxu0 0.0
      %1227 = vmatpush1.msra.mxu0 0.0
      %1228 = vmatprep.subr.mxu0 0.0
      %1229 = vmatpush1.msra.mxu0 0.0
      %1230 = vmatprep.subr.mxu0 0.0
      %1231 = vmatpush1.msra.mxu0 0.0
      %1232 = vmatprep.subr.mxu0 0.0
      %1233 = vmatpush1.msra.mxu0 0.0
      %1234 = vmatprep.subr.mxu0 0.0
      %1235 = vmatpush1.msra.mxu0 0.0
      %1236 = vmatprep.subr.mxu0 0.0
      %1237 = vmatpush1.msra.mxu0 0.0
      %1238 = vmatprep.subr.mxu0 0.0
      %1239 = vmatpush1.msra.mxu0 0.0
      %1240 = vmatprep.subr.mxu0 0.0
      %1241 = vmatpush1.msra.mxu0 0.0
      %1242 = vmatprep.subr.mxu0 0.0
      %1243 = vmatpush1.msra.mxu0 0.0
      %1244 = vmatprep.subr.mxu0 0.0
      %1245 = vmatpush1.msra.mxu0 0.0
      %1246 = vmatprep.subr.mxu0 0.0
      %1247 = vmatpush1.msra.mxu0 0.0
      %1248 = vmatprep.subr.mxu0 0.0
      %1249 = vmatpush1.msra.mxu0 0.0
      %1250 = vmatprep.subr.mxu0 0.0
      %1251 = vmatpush1.msra.mxu0 0.0
      %1252 = vmatprep.subr.mxu0 0.0
      %1253 = vmatpush1.msra.mxu0 0.0
      %1254 = vmatprep.subr.mxu0 0.0
      %1255 = vmatpush1.msra.mxu0 0.0
      %1256 = vmatprep.subr.mxu0 0.0
      %1257 = vmatpush1.msra.mxu0 0.0
      %1258 = vmatprep.mubr.f32.mxu0 0.0
      %v1259 = vand.u32 %v787, 4294901760
      %1260 = vmatmul.mubr.f32.gmra.mrb[0].mxu0 %v1259
      %v1261 = vpop.f32.mrb[0].mxu0
      %v1262 = vadd.f32 %v1164, %v1261
      %v1263 = vpop.f32.mrb[0].mxu0
      %1264 = vmatprep.mubr.f32.mxu0 0.0
      %v1265 = vand.u32 %v790, 4294901760
      %1266 = vmatmul.mubr.f32.gmra.mrb[0].mxu0 %v1265
      %v1267 = vpop.f32.mrb[0].mxu0
      %v1268 = vadd.f32 %v1172, %v1267
      %v1269 = vpop.f32.mrb[0].mxu0
      %1270 = vmatprep.mubr.f32.mxu0 0.0
      %v1271 = vand.u32 %v793, 4294901760
      %1272 = vmatmul.mubr.f32.gmra.mrb[0].mxu0 %v1271
      %v1273 = vpop.f32.mrb[0].mxu0
      %v1274 = vadd.f32 %v1180, %v1273
      %v1275 = vpop.f32.mrb[0].mxu0
      %1276 = vmatprep.mubr.f32.mxu0 0.0
      %v1277 = vand.u32 %v796, 4294901760
      %1278 = vmatmul.mubr.f32.gmra.mrb[0].mxu0 %v1277
      %v1279 = vpop.f32.mrb[0].mxu0
      %v1280 = vadd.f32 %v1188, %v1279
      %v1281 = vpop.f32.mrb[0].mxu0
      %1282 = vdwg.mxu0
      %1283 = vmatprep.subr.mxu0 0.0
      %v1284 = vand.u32 %v764, 4294901760
      %1285 = vmatpush1.msra.mxu0 %v1284
      %1286 = vmatprep.subr.mxu0 0.0
      %1287 = vmatpush1.msra.mxu0 0.0
      %1288 = vmatprep.subr.mxu0 0.0
      %1289 = vmatpush1.msra.mxu0 0.0
      %1290 = vmatprep.subr.mxu0 0.0
      %1291 = vmatpush1.msra.mxu0 0.0
      %1292 = vmatprep.subr.mxu0 0.0
      %1293 = vmatpush1.msra.mxu0 0.0
      %1294 = vmatprep.subr.mxu0 0.0
      %1295 = vmatpush1.msra.mxu0 0.0
      %1296 = vmatprep.subr.mxu0 0.0
      %1297 = vmatpush1.msra.mxu0 0.0
      %1298 = vmatprep.subr.mxu0 0.0
      %1299 = vmatpush1.msra.mxu0 0.0
      %1300 = vmatprep.subr.mxu0 0.0
      %1301 = vmatpush1.msra.mxu0 0.0
      %1302 = vmatprep.subr.mxu0 0.0
      %1303 = vmatpush1.msra.mxu0 0.0
      %1304 = vmatprep.subr.mxu0 0.0
      %1305 = vmatpush1.msra.mxu0 0.0
      %1306 = vmatprep.subr.mxu0 0.0
      %1307 = vmatpush1.msra.mxu0 0.0
      %1308 = vmatprep.subr.mxu0 0.0
      %1309 = vmatpush1.msra.mxu0 0.0
      %1310 = vmatprep.subr.mxu0 0.0
      %1311 = vmatpush1.msra.mxu0 0.0
      %1312 = vmatprep.subr.mxu0 0.0
      %1313 = vmatpush1.msra.mxu0 0.0
      %1314 = vmatprep.subr.mxu0 0.0
      %1315 = vmatpush1.msra.mxu0 0.0
      %1316 = vmatprep.subr.mxu0 0.0
      %1317 = vmatpush1.msra.mxu0 0.0
      %1318 = vmatprep.subr.mxu0 0.0
      %1319 = vmatpush1.msra.mxu0 0.0
      %1320 = vmatprep.subr.mxu0 0.0
      %1321 = vmatpush1.msra.mxu0 0.0
      %1322 = vmatprep.subr.mxu0 0.0
      %1323 = vmatpush1.msra.mxu0 0.0
      %1324 = vmatprep.subr.mxu0 0.0
      %1325 = vmatpush1.msra.mxu0 0.0
      %1326 = vmatprep.subr.mxu0 0.0
      %1327 = vmatpush1.msra.mxu0 0.0
      %1328 = vmatprep.subr.mxu0 0.0
      %1329 = vmatpush1.msra.mxu0 0.0
      %1330 = vmatprep.subr.mxu0 0.0
      %1331 = vmatpush1.msra.mxu0 0.0
      %1332 = vmatprep.subr.mxu0 0.0
      %1333 = vmatpush1.msra.mxu0 0.0
      %1334 = vmatprep.subr.mxu0 0.0
      %1335 = vmatpush1.msra.mxu0 0.0
      %1336 = vmatprep.subr.mxu0 0.0
      %1337 = vmatpush1.msra.mxu0 0.0
      %1338 = vmatprep.subr.mxu0 0.0
      %1339 = vmatpush1.msra.mxu0 0.0
      %1340 = vmatprep.subr.mxu0 0.0
      %1341 = vmatpush1.msra.mxu0 0.0
      %1342 = vmatprep.subr.mxu0 0.0
      %1343 = vmatpush1.msra.mxu0 0.0
      %1344 = vmatprep.subr.mxu0 0.0
      %1345 = vmatpush1.msra.mxu0 0.0
      %1346 = vmatprep.subr.mxu0 0.0
      %1347 = vmatpush1.msra.mxu0 0.0
      %1348 = vmatprep.mubr.f32.mxu0 0.0
      %v1349 = vand.u32 %v787, 4294901760
      %1350 = vmatmul.mubr.f32.gmra.mrb[0].mxu0 %v1349
      %v1351 = vpop.f32.mrb[0].mxu0
      %v1352 = vadd.f32 %v1262, %v1351
      %v1353 = vpop.f32.mrb[0].mxu0
      %1354 = vmatprep.mubr.f32.mxu0 0.0
      %v1355 = vand.u32 %v790, 4294901760
      %1356 = vmatmul.mubr.f32.gmra.mrb[0].mxu0 %v1355
      %v1357 = vpop.f32.mrb[0].mxu0
      %v1358 = vadd.f32 %v1268, %v1357
      %v1359 = vpop.f32.mrb[0].mxu0
      %1360 = vmatprep.mubr.f32.mxu0 0.0
      %v1361 = vand.u32 %v793, 4294901760
      %1362 = vmatmul.mubr.f32.gmra.mrb[0].mxu0 %v1361
      %v1363 = vpop.f32.mrb[0].mxu0
      %v1364 = vadd.f32 %v1274, %v1363
      %v1365 = vpop.f32.mrb[0].mxu0
      %1366 = vmatprep.mubr.f32.mxu0 0.0
      %v1367 = vand.u32 %v796, 4294901760
      %1368 = vmatmul.mubr.f32.gmra.mrb[0].mxu0 %v1367
      %v1369 = vpop.f32.mrb[0].mxu0
      %v1370 = vadd.f32 %v1280, %v1369
      %v1371 = vpop.f32.mrb[0].mxu0
      %1372 = vdwg.mxu0
      %v1373 = vxor.u32 %v1352, 2147483648
      %v1374 = vxor.u32 %v1358, 2147483648
      %v1375 = vxor.u32 %v1364, 2147483648
      %v1376 = vxor.u32 %v1370, 2147483648
      %v1377 = vmul.f32 %v1373, 1.442695
      %v1378 = vpow.pop %v1377
      %v1379 = vmul.f32 %v1374, 1.442695
      %v1380 = vpow.pop %v1379
      %v1381 = vmul.f32 %v1375, 1.442695
      %v1382 = vpow.pop %v1381
      %v1383 = vmul.f32 %v1376, 1.442695
      %v1384 = vpow.pop %v1383
      %v1385 = vadd.f32 %v1378, 1.0
      %v1386 = vadd.f32 %v1380, 1.0
      %v1387 = vadd.f32 %v1382, 1.0
      %v1388 = vadd.f32 %v1384, 1.0
      %v1389 = vrcp.pop %v1385
      %v1390 = vmul.f32 1.0, %v1389
      %v1391 = vrcp.pop %v1386
      %v1392 = vmul.f32 1.0, %v1391
      %v1393 = vrcp.pop %v1387
      %v1394 = vmul.f32 1.0, %v1393
      %v1395 = vrcp.pop %v1388
      %v1396 = vmul.f32 1.0, %v1395
      %v1397 = vmul.f32 %v266, %v1390
      %v1398 = vmul.f32 %v267, %v1392
      %v1399 = vmul.f32 %v268, %v1394
      %v1400 = vmul.f32 %v269, %v1396
      %vm1401 = vcmask 130048
      %1402 = vst.msk [vmem:[%s255] sm:$0xff] %vm1401, %v1397
      %1403 = vst.msk [vmem:[%s255 + $0x8] sm:$0xff] %vm1401, %v1398
      %1404 = vst.msk [vmem:[%s255 + $0x10] sm:$0xff] %vm1401, %v1399
      %1405 = vst.msk [vmem:[%s255 + $0x18] sm:$0xff] %vm1401, %v1400
      %p1406 = scmp.lt.s32.totalorder %s20, 1
      %s1407 = scalar_select %p1406, %s20, 1
      %p1408 = scmp.lt.s32.totalorder %s21, 0
      %s1409 = scalar_select %p1408, %s21, 0
      %s1410 = smul.addr %s1407, 4
      %s1411 = sadd.s32 %s1409, %s1410
      %s1412 = smul.addr %s1411, 8
      %s1413 = scalar_lea.vmem %s5, %s1412
      // Predicated region
      $region41: #{attention_block.1} parent=39 // pred_check
        %p1414 = pneg %p160
      $region42: #{attention_block.1} parent=39 // pred_check_branch
        %1416 = sbr.rel (%p1414) target = $region44
      $region43: #{attention_block.1} parent=39 // pred_region
        _
      $region44: #{attention_block.1} parent=39 // pred_fallthru
        _
    $region40: #{attention_block.1} parent=5 // pred_fallthru
      _
    %p1417 = scmp.le.s32.totalorder 2, %s11
    // Predicated region
    $region45: #{attention_block.1} parent=5 // pred_check
      %p1418 = pneg %p1417
    $region46: #{attention_block.1} parent=5 // pred_check_branch
      %1420 = sbr.rel (%p1418) target = $region48
    $region47: #{attention_block.1} parent=5 // pred_region
      %s1421 = ssub.s32 %s11, 2
      // Predicated region
      $region49: #{attention_block.1} parent=47 // pred_check
        %p1422 = pneg %p166
      $region50: #{attention_block.1} parent=47 // pred_check_branch
        %1424 = sbr.rel (%p1422) target = $region52
      $region51: #{attention_block.1} parent=47 // pred_region
        %p1425 = scmp.lt.s32.totalorder %s22, 1
        %s1426 = scalar_select %p1425, %s22, 1
        %p1427 = scmp.lt.s32.totalorder %s23, 0
        %s1428 = scalar_select %p1427, %s23, 0
        %s1429 = smul.addr %s1426, 4
        %s1430 = sadd.s32 %s1428, %s1429
        %s1431 = smul.addr %s1430, 8
        %s1432 = scalar_lea.vmem %s5, %s1431
      $region52: #{attention_block.1} parent=47 // pred_fallthru
        _
    $region48: #{attention_block.1} parent=5 // pred_fallthru
      _
  $region6: #{attention_block.1} parent=0 // loop_footer
    %s15 = sadd.s32 1, %s11
  $region7: #{attention_block.1} parent=0 // loop_footer_branch
    %10 = sbr.rel target = $region3
  $region8: #{attention_block.1} parent=0 // loop_exit
    _

</llo_original>
